<compile_context>
chip_gen: v5e
topology: v5e:2x2
jax: 0.10.0
libtpu: 0.0.40
codegen_flags: <defaults>
</compile_context>

<pallas_src>
import jax
import jax.numpy as jnp
import numpy as np
from jax.experimental import pallas as pl
from jax.experimental.pallas import tpu as pltpu

_MASK_FILL = -1.0e10   # unavailable actions (same constant as the PyTorch code)
_PAD_FILL = -2.0e10    # nonexistent (padded) action columns; strictly below _MASK_FILL


def _round_up(x, m):
    return ((x + m - 1) // m) * m


# ----------------------------- Pallas kernels ---------------------------------
def _finish_softmax(logits, logp_ref, probs_ref):
    m = jnp.max(logits, axis=-1, keepdims=True)
    shifted = logits - m
    e = jnp.exp(shifted)
    s = jnp.sum(e, axis=-1, keepdims=True)
    # normalized log-probs: shifted - log(s) == logits - logsumexp(logits)
    logp_ref[...] = shifted - jnp.log(s)
    # per-row divide on the EUP slot (approx reciprocal ~free next to VALU work)
    probs_ref[...] = e * pl.reciprocal(s, approx=True)


def _categorical_kernel_nomask(x_ref, wT_ref, b_ref, logp_ref, probs_ref):
    logits = jnp.dot(x_ref[...], wT_ref[...],
                     preferred_element_type=jnp.float32) + b_ref[...]
    _finish_softmax(logits, logp_ref, probs_ref)


def _categorical_kernel_mask(x_ref, wT_ref, b_ref, mask_ref, logp_ref, probs_ref):
    logits = jnp.dot(x_ref[...], wT_ref[...],
                     preferred_element_type=jnp.float32) + b_ref[...]
    # integer mask: ==0 is exact; padded columns carry mask=1 so their -2e10 bias
    # flows through untouched (keeps all-masked rows uniform over real actions).
    logits = jnp.where(mask_ref[...] == 0, jnp.float32(_MASK_FILL), logits)
    _finish_softmax(logits, logp_ref, probs_ref)


# ---------------------- FixedCategorical-style wrapper ------------------------
class FixedCategoricalJax:
    """Mirrors FixedCategorical. `.logits` is the normalized log-prob table,
    which is exactly what torch.distributions.Categorical exposes as `.logits`."""

    def __init__(self, log_probs, probs):
        self.logits = log_probs
        self.probs = probs

    def mode(self):
        return jnp.argmax(self.probs, axis=-1, keepdims=True)

    def log_probs(self, actions):
        a = actions.reshape(actions.shape[0], -1)
        lp = jnp.take_along_axis(self.logits, a, axis=-1)
        return lp.sum(-1, keepdims=True)

    def sample(self, key):
        # TODO(synk): sampling could be fused into the kernel via pltpu.prng_* (Gumbel trick);
        # kept in the wrapper here to preserve the stateless jax.random key interface.
        return jax.random.categorical(key, self.logits, axis=-1)[:, None]

    def entropy(self):
        return -(self.probs * self.logits).sum(-1)


# -------------------------------- module --------------------------------------
class CategoricalHead:
    """Pallas-backed Categorical action head.

    weight: (num_outputs, num_inputs) like torch.nn.Linear; bias: (num_outputs,).
    The transpose + lane padding of the parameters happens ONCE here, not per call.
    """

    def __init__(self, weight, bias, compute_dtype=jnp.float32, max_tile_b=512):
        self.num_outputs, self.num_inputs = weight.shape
        self.d_pad = _round_up(max(self.num_outputs, 128), 128)   # lane-dense action dim
        self.compute_dtype = compute_dtype
        self.max_tile_b = max_tile_b

        wT = weight.T.astype(jnp.float32)                                   # (Din, Dout)
        self.wT = jnp.pad(
            wT, ((0, 0), (0, self.d_pad - self.num_outputs))
        ).astype(compute_dtype)                                             # (Din, Dpad)
        self.bias = jnp.concatenate(
            [bias.astype(jnp.float32),
             jnp.full((self.d_pad - self.num_outputs,), _PAD_FILL, jnp.float32)]
        ).reshape(1, self.d_pad)                                            # (1, Dpad)

    def __call__(self, x, available_actions=None):
        B = x.shape[0]
        din, d_pad = self.num_inputs, self.d_pad
        # batch tiling: multiple of 8, capped at 512 (fits v7x's 64 MiB VMEM comfortably)
        tile_b = min(self.max_tile_b, _round_up(B, 8))
        b_pad = _round_up(B, tile_b)

        x_p = jnp.pad(x.astype(self.compute_dtype), ((0, b_pad - B), (0, 0)))

        row_spec = pl.BlockSpec((tile_b, d_pad), lambda i: (i, 0))
        in_specs = [
            pl.BlockSpec((tile_b, din), lambda i: (i, 0)),   # x tile
            pl.BlockSpec((din, d_pad), lambda i: (0, 0)),    # W^T (grid-invariant)
            pl.BlockSpec((1, d_pad), lambda i: (0, 0)),      # bias (grid-invariant)
        ]
        args = [x_p, self.wT, self.bias]

        if available_actions is None:
            kernel = _categorical_kernel_nomask                # no mask DMA at all
        else:
            kernel = _categorical_kernel_mask
            mask = jnp.pad(available_actions.astype(jnp.int32),
                           ((0, b_pad - B), (0, d_pad - self.num_outputs)),
                           constant_values=1)                  # pad cols "available"
            in_specs.append(row_spec)
            args.append(mask)

        out_sds = jax.ShapeDtypeStruct((b_pad, d_pad), jnp.float32)
        logp, probs = pl.pallas_call(
            kernel,
            out_shape=(out_sds, out_sds),
            grid=(b_pad // tile_b,),
            in_specs=in_specs,
            out_specs=(row_spec, row_spec),
            compiler_params=pltpu.CompilerParams(
                dimension_semantics=("parallel",),          # megacore sharding on v7x
                vmem_limit_bytes=32 * 1024 * 1024,          # tiles are tiny; safe on v5e/v6e/v7x
            ),
        )(*args)

        return FixedCategoricalJax(logp[:B, :self.num_outputs],
                                   probs[:B, :self.num_outputs])


# ------------------------- deterministic parameter init -----------------------
def orthogonal_(key, rows, cols, gain):
    """Matches torch.nn.init.orthogonal_ semantics for a 2-D weight."""
    a = jax.random.normal(key, (rows, cols), dtype=jnp.float32)
    flat = a.T if rows < cols else a
    q, r = jnp.linalg.qr(flat)
    d = jnp.sign(jnp.diagonal(r))
    q = q * d[None, :]
    if rows < cols:
        q = q.T
    return gain * q


def make_categorical_params(key, num_inputs, num_outputs, gain=0.01):
    weight = orthogonal_(key, num_outputs, num_inputs, gain)   # (Dout, Din)
    bias = jnp.zeros((num_outputs,), dtype=jnp.float32)
    return weight, bias


# ------------------------------------ main ------------------------------------
if __name__ == "__main__":
    num_inputs, num_outputs, batch = 32, 16, 8

    key = jax.random.PRNGKey(0)
    k_w, k_x, k_m, k_s = jax.random.split(key, 4)

    weight, bias = make_categorical_params(k_w, num_inputs, num_outputs, gain=0.01)
    x = jax.random.normal(k_x, (batch, num_inputs), dtype=jnp.float32)
    # deterministic availability mask with a few zeros (1 = available, 0 = masked)
    available = (jax.random.uniform(k_m, (batch, num_outputs)) > 0.2).astype(jnp.float32)

    # --- f32 path, masked ---
    head = CategoricalHead(weight, bias)                   # compute_dtype=f32
    dist = head(x, available)
    jax.block_until_ready((dist.logits, dist.probs))

    # plain-JAX reference mirroring PyTorch semantics
    ref_logits = x @ weight.T + bias
    ref_logits = jnp.where(available == 0.0, _MASK_FILL, ref_logits)
    ref_logp = ref_logits - jax.scipy.special.logsumexp(ref_logits, axis=-1, keepdims=True)
    ref_probs = jax.nn.softmax(ref_logits, axis=-1)
    assert np.allclose(dist.logits, ref_logp, rtol=1e-4, atol=1e-4)
    assert np.allclose(dist.probs, ref_probs, rtol=1e-3, atol=1e-3)   # approx reciprocal

    # --- f32 path, no mask (mask-free kernel variant, no mask DMA) ---
    dist_nm = head(x, None)
    jax.block_until_ready(dist_nm.probs)
    ref_probs_nm = jax.nn.softmax(x @ weight.T + bias, axis=-1)
    assert np.allclose(dist_nm.probs, ref_probs_nm, rtol=1e-3, atol=1e-3)

    # --- bf16 matmul-input path (halves x / W^T DMA bytes on v6e/v7x) ---
    head_bf16 = CategoricalHead(weight, bias, compute_dtype=jnp.bfloat16)
    dist_bf = head_bf16(x, available)
    jax.block_until_ready(dist_bf.probs)
    assert float(jnp.max(jnp.abs(dist_bf.probs - ref_probs))) < 5e-2
    assert np.allclose(jnp.sum(dist_bf.probs, axis=-1), 1.0, atol=1e-2)

    # exercise the FixedCategorical-style API (glue ops)
    _ = jax.block_until_ready(dist.mode())
    _ = jax.block_until_ready(dist.log_probs(dist.mode()))
    _ = jax.block_until_ready(dist.sample(k_s))
    _ = jax.block_until_ready(dist.entropy())

    print("KERNEL_OK")
</pallas_src>

<mosaic_0001>
module attributes {stable_mosaic.version = 11 : i64} {
  func.func @_categorical_kernel_mask(%arg0: i32, %arg1: memref<8x32xf32, #tpu.memory_space<vmem>>, %arg2: memref<32x128xf32, #tpu.memory_space<vmem>>, %arg3: memref<1x128xf32, #tpu.memory_space<vmem>>, %arg4: memref<8x128xi32, #tpu.memory_space<vmem>>, %arg5: memref<8x128xf32, #tpu.memory_space<vmem>>, %arg6: memref<8x128xf32, #tpu.memory_space<vmem>>) attributes {dimension_semantics = [#tpu.dimension_semantics<parallel>], iteration_bounds = array<i64: 1>, scalar_prefetch = 0 : i64, scratch_operands = 0 : i64, tpu.core_type = #tpu.core_type<tc>, window_params = [{transform_indices = @transform_0, window_bounds = array<i64: 8, 32>}, {pipeline_mode = #tpu.pipeline_mode<synchronous>, transform_indices = @transform_1, window_bounds = array<i64: 32, 128>}, {pipeline_mode = #tpu.pipeline_mode<synchronous>, transform_indices = @transform_2, window_bounds = array<i64: 1, 128>}, {transform_indices = @transform_3, window_bounds = array<i64: 8, 128>}, {transform_indices = @transform_4, window_bounds = array<i64: 8, 128>}, {transform_indices = @transform_5, window_bounds = array<i64: 8, 128>}]} {
    %c0 = arith.constant 0 : index
    %c0_0 = arith.constant 0 : index
    %0 = vector.load %arg1[%c0, %c0_0] : memref<8x32xf32, #tpu.memory_space<vmem>>, vector<8x32xf32>
    %c0_1 = arith.constant 0 : index
    %c0_2 = arith.constant 0 : index
    %1 = vector.load %arg2[%c0_1, %c0_2] : memref<32x128xf32, #tpu.memory_space<vmem>>, vector<32x128xf32>
    %cst = arith.constant dense<0.000000e+00> : vector<8x128xf32>
    %2 = tpu.matmul %0, %1, %cst {dimension_numbers = #tpu.dot_dimension_numbers<[1], [0], [0], [1], [0, 0, 1, 1], [], []>} : vector<8x32xf32>, vector<32x128xf32>, vector<8x128xf32> -> vector<8x128xf32>
    %c0_3 = arith.constant 0 : index
    %c0_4 = arith.constant 0 : index
    %3 = vector.load %arg3[%c0_3, %c0_4] : memref<1x128xf32, #tpu.memory_space<vmem>>, vector<1x128xf32>
    %4 = vector.broadcast %3 : vector<1x128xf32> to vector<8x128xf32>
    %5 = arith.addf %2, %4 : vector<8x128xf32>
    %c0_5 = arith.constant 0 : index
    %c0_6 = arith.constant 0 : index
    %6 = vector.load %arg4[%c0_5, %c0_6] : memref<8x128xi32, #tpu.memory_space<vmem>>, vector<8x128xi32>
    %c0_i32 = arith.constant 0 : i32
    %7 = vector.broadcast %c0_i32 : i32 to vector<8x128xi32>
    %8 = arith.cmpi eq, %6, %7 : vector<8x128xi32>
    %cst_7 = arith.constant -1.000000e+10 : f32
    %9 = vector.broadcast %cst_7 : f32 to vector<8x128xf32>
    %10 = arith.select %8, %9, %5 : vector<8x128xi1>, vector<8x128xf32>
    %cst_8 = arith.constant dense<0xFF800000> : vector<8xf32>
    %11 = vector.multi_reduction <maximumf>, %10, %cst_8 [1] : vector<8x128xf32> to vector<8xf32>
    %12 = vector.shape_cast %11 : vector<8xf32> to vector<8x1xf32>
    %13 = vector.broadcast %12 : vector<8x1xf32> to vector<8x128xf32>
    %14 = arith.subf %10, %13 : vector<8x128xf32>
    %15 = math.exp %14 : vector<8x128xf32>
    %cst_9 = arith.constant dense<0.000000e+00> : vector<8xf32>
    %16 = vector.multi_reduction <add>, %15, %cst_9 [1] : vector<8x128xf32> to vector<8xf32>
    %17 = vector.shape_cast %16 : vector<8xf32> to vector<8x1xf32>
    %18 = math.log %17 : vector<8x1xf32>
    %19 = vector.broadcast %18 : vector<8x1xf32> to vector<8x128xf32>
    %20 = arith.subf %14, %19 : vector<8x128xf32>
    %c0_10 = arith.constant 0 : index
    %c0_11 = arith.constant 0 : index
    %21 = vector.load %arg5[%c0_10, %c0_11] : memref<8x128xf32, #tpu.memory_space<vmem>>, vector<8x128xf32>
    tpu.vector_store %arg5[%c0_10, %c0_11], %20 {strides = array<i32>} : memref<8x128xf32, #tpu.memory_space<vmem>>, vector<8x128xf32>,
    %22 = tpu.reciprocal %17 {approx = true} : vector<8x1xf32> -> vector<8x1xf32>
    %23 = vector.broadcast %22 : vector<8x1xf32> to vector<8x128xf32>
    %24 = arith.mulf %15, %23 : vector<8x128xf32>
    %c0_12 = arith.constant 0 : index
    %c0_13 = arith.constant 0 : index
    %25 = vector.load %arg6[%c0_12, %c0_13] : memref<8x128xf32, #tpu.memory_space<vmem>>, vector<8x128xf32>
    tpu.vector_store %arg6[%c0_12, %c0_13], %24 {strides = array<i32>} : memref<8x128xf32, #tpu.memory_space<vmem>>, vector<8x128xf32>,
    return
  }
  func.func @transform_0(%arg0: i32) -> (i32, i32) {
    %c0_i32 = arith.constant 0 : i32
    %c0_i32_0 = arith.constant 0 : i32
    return %arg0, %c0_i32 : i32, i32
  }
  func.func @transform_1(%arg0: i32) -> (i32, i32) {
    %c0_i32 = arith.constant 0 : i32
    %c0_i32_0 = arith.constant 0 : i32
    %c0_i32_1 = arith.constant 0 : i32
    return %c0_i32, %c0_i32_0 : i32, i32
  }
  func.func @transform_2(%arg0: i32) -> (i32, i32) {
    %c0_i32 = arith.constant 0 : i32
    %c0_i32_0 = arith.constant 0 : i32
    %c0_i32_1 = arith.constant 0 : i32
    return %c0_i32, %c0_i32_0 : i32, i32
  }
  func.func @transform_3(%arg0: i32) -> (i32, i32) {
    %c0_i32 = arith.constant 0 : i32
    %c0_i32_0 = arith.constant 0 : i32
    return %arg0, %c0_i32 : i32, i32
  }
  func.func @transform_4(%arg0: i32) -> (i32, i32) {
    %c0_i32 = arith.constant 0 : i32
    %c0_i32_0 = arith.constant 0 : i32
    return %arg0, %c0_i32 : i32, i32
  }
  func.func @transform_5(%arg0: i32) -> (i32, i32) {
    %c0_i32 = arith.constant 0 : i32
    %c0_i32_0 = arith.constant 0 : i32
    return %arg0, %c0_i32 : i32, i32
  }
}

</mosaic_0001>

<llo_original>
// kernel: tpu_custom_call.1
$region0: #{tpu_custom_call.1}
  #allocation0 [shape = 'u32[]', space=smem, size = 0x4, offset = 0x4, fixed_abs, tag = 'smem constant byte address 0x4 - core index']
  #allocation1 [shape = 'u32[72,128]{1,0:T(1,128)}', space=vmem, size = 0x9000, scoped, tag = 'internal scratch']
  %s0 = inlined_call_operand.hbm [shape: f32[8,32], index: 0, kind: input, shape index: {}]
  %s1 = inlined_call_operand.hbm [shape: f32[32,128], index: 1, kind: input, shape index: {}]
  %s2 = inlined_call_operand.vmem [shape: f32[1,128], index: 2, kind: input, shape index: {}]
  %s3 = inlined_call_operand.hbm [shape: s32[8,128], index: 3, kind: input, shape index: {}]
  %s4 = inlined_call_operand.hbm [shape: f32[8,128], index: 4, kind: output, shape index: {0}]
  %s5 = inlined_call_operand.hbm [shape: f32[8,128], index: 5, kind: output, shape index: {1}]
  %6 = xla_tuple %s4, %s5
  %s7 = sld [smem:[#allocation0]]
  $region46: #{tpu_custom_call.1} parent=0
    _
  %s9 = ssub.s32 1, %s7
  %s10 = scalar_select 0, %s9, %s7
  $region1: #{tpu_custom_call.1} parent=0
    #allocation2 [shape = 'u8[4096]{0}', space=vmem, size = 0x1000, scoped, tag = 'input window, operand 0, single buffered']
    #allocation3 [shape = 's32[1]{0}', space=sflag, size = 0x4, scoped, tag = 'scoped memory for tpu_custom_call.1']
    #allocation4 [shape = 's32[1]{0}', space=sflag, size = 0x4, scoped, tag = 'scoped memory for tpu_custom_call.1']
    #allocation5 [shape = 'u8[16384]{0}', space=vmem, size = 0x4000, scoped, tag = 'input window, operand 1, single buffered']
    #allocation6 [shape = 's32[1]{0}', space=sflag, size = 0x4, scoped, tag = 'scoped memory for tpu_custom_call.1']
    #allocation7 [shape = 'u8[4096]{0}', space=vmem, size = 0x1000, scoped, tag = 'input window, operand 3, single buffered']
    #allocation8 [shape = 'u8[4096]{0}', space=vmem, size = 0x1000, scoped, tag = 'output window, operand 0, single buffered']
    #allocation9 [shape = 'u8[4096]{0}', space=vmem, size = 0x1000, scoped, tag = 'output window, operand 1, single buffered']
    #allocation10 [shape = 's32[1]{0}', space=sflag, size = 0x4, scoped, tag = 'scoped memory for tpu_custom_call.1']
    %11 = vsyncpa [#allocation3], 0
    %12 = vsyncpa [#allocation6], 0
    %13 = vsyncpa [#allocation4], 0
    %14 = vsyncpa [#allocation10], 0
    // Predicated region
    $region2: #{tpu_custom_call.1} parent=1 // pred_check
      _
    $region3: #{tpu_custom_call.1} parent=1 // pred_check_branch
      %16 = sbr.rel (0) target = $region5
    $region4: #{tpu_custom_call.1} parent=1 // pred_region
      %18 = vsyncadd [#allocation3], 0
      %s20 = sshll.u32 %s0, 4
      %s21 = int_to_ptr.hbm [resolvable:$true] %s20
      %s22 = sshll.u32 [#allocation2], 4
      %s23 = int_to_ptr.vmem [resolvable:$true] %s22
      %25 = dma.hbm_to_vmem [thread:$0]  %s21, 128, %s23, [#allocation3]
    $region5: #{tpu_custom_call.1} parent=1 // pred_fallthru
      _
    // Predicated region
    $region6: #{tpu_custom_call.1} parent=1 // pred_check
      _
    $region7: #{tpu_custom_call.1} parent=1 // pred_check_branch
      %27 = sbr.rel (0) target = $region9
    $region8: #{tpu_custom_call.1} parent=1 // pred_region
      %29 = vsyncadd [#allocation6], 0
      %s30 = sshll.u32 %s1, 4
      %s31 = int_to_ptr.hbm [resolvable:$true] %s30
      %s32 = sshll.u32 [#allocation5], 4
      %s33 = int_to_ptr.vmem [resolvable:$true] %s32
      %38 = dma.hbm_to_vmem [thread:$0]  %s31, 512, %s33, [#allocation6], 128, 128, 8
    $region9: #{tpu_custom_call.1} parent=1 // pred_fallthru
      _
    // Predicated region
    $region10: #{tpu_custom_call.1} parent=1 // pred_check
      _
    $region11: #{tpu_custom_call.1} parent=1 // pred_check_branch
      %40 = sbr.rel (0) target = $region13
    $region12: #{tpu_custom_call.1} parent=1 // pred_region
      _
    $region13: #{tpu_custom_call.1} parent=1 // pred_fallthru
      _
    // Predicated region
    $region14: #{tpu_custom_call.1} parent=1 // pred_check
      _
    $region15: #{tpu_custom_call.1} parent=1 // pred_check_branch
      %42 = sbr.rel (0) target = $region17
    $region16: #{tpu_custom_call.1} parent=1 // pred_region
      %44 = vsyncadd [#allocation6], 0
      %s46 = sshll.u32 %s3, 4
      %s47 = int_to_ptr.hbm [resolvable:$true] %s46
      %s48 = sshll.u32 [#allocation7], 4
      %s49 = int_to_ptr.vmem [resolvable:$true] %s48
      %51 = dma.hbm_to_vmem [thread:$0]  %s47, 128, %s49, [#allocation6]
    $region17: #{tpu_custom_call.1} parent=1 // pred_fallthru
      _
    // Predicated region
    $region18: #{tpu_custom_call.1} parent=1 // pred_check
      _
    $region19: #{tpu_custom_call.1} parent=1 // pred_check_branch
      %53 = sbr.rel (0) target = $region21
    $region20: #{tpu_custom_call.1} parent=1 // pred_region
      %55 = dma.done [#allocation3], 128
    $region21: #{tpu_custom_call.1} parent=1 // pred_fallthru
      _
    // Predicated region
    $region22: #{tpu_custom_call.1} parent=1 // pred_check
      _
    $region23: #{tpu_custom_call.1} parent=1 // pred_check_branch
      %57 = sbr.rel (0) target = $region25
    $region24: #{tpu_custom_call.1} parent=1 // pred_region
      %59 = dma.done [#allocation6], 512
    $region25: #{tpu_custom_call.1} parent=1 // pred_fallthru
      _
    // Predicated region
    $region26: #{tpu_custom_call.1} parent=1 // pred_check
      _
    $region27: #{tpu_custom_call.1} parent=1 // pred_check_branch
      %61 = sbr.rel (0) target = $region29
    $region28: #{tpu_custom_call.1} parent=1 // pred_region
      %63 = dma.done [#allocation6], 128
    $region29: #{tpu_custom_call.1} parent=1 // pred_fallthru
      _
    %v64 = vld [vmem:[#allocation2] sm:$0xff]
    %v65 = vld [vmem:[#allocation5] sm:$0xff]
    %v66 = vld [vmem:[#allocation5 + $0x8] sm:$0xff]
    %v67 = vld [vmem:[#allocation5 + $0x10] sm:$0xff]
    %v68 = vld [vmem:[#allocation5 + $0x18] sm:$0xff]
    %v69 = vld [vmem:[%s2] sm:$0x1]
    %v71 = vperm.slane %v69, 0
    %vm73 = vcmask 261120
    %v75 = vsel %vm73, %v64, 0
    %77 = vmatpush.msra.mxu0 0.0
    %78 = vmatpush.msra.mxu0 0.0
    %79 = vmatpush.msra.mxu0 0.0
    %80 = vmatpush.msra.mxu0 0.0
    %81 = vmatpush.msra.mxu0 0.0
    %82 = vmatpush.msra.mxu0 0.0
    %83 = vmatpush.msra.mxu0 0.0
    %84 = vmatpush.msra.mxu0 0.0
    %85 = vmatpush.msra.mxu0 0.0
    %86 = vmatpush.msra.mxu0 0.0
    %87 = vmatpush.msra.mxu0 0.0
    %88 = vmatpush.msra.mxu0 0.0
    %89 = vmatpush.msra.mxu0 %v68
    %90 = vmatpush.msra.mxu0 %v67
    %91 = vmatpush.msra.mxu0 %v66
    %92 = vmatpush.msra.mxu0 %v65
    %93 = vmatmul.f32.gmra.mxu0 %v75
    %v94 = vpop.f32.mrf.mxu0
    %v95 = vadd.f32 %v71, %v94
    %96 = vdwg.mxu0
    %v97 = vld [vmem:[#allocation7] sm:$0xff]
    %vm98 = vcmp.eq.s32.totalorder %v97, 0
    %v99 = vsel %vm98, -1e+10, %v95
    %100 = vmax.xlane.f32.xlu0 %v99
    %v101 = vpop.xlane.xlu0 %100
    %v102 = vsub.f32 %v99, %v101
    %v103 = vmul.f32 %v102, 1.442695
    %v104 = vpow.pop %v103
    %105 = vadd.xlane.f32.xlu0 %v104
    %v106 = vpop.xlane.xlu0 %105
    %v107 = vlog2.pop %v106
    %v108 = vmul.f32 %v107, 0.6931472
    %v109 = vsub.f32 %v102, %v108
    %110 = vst [vmem:[#allocation8] sm:$0xff] %v109
    %v111 = vrcp.pop %v106
    %v112 = vmul.f32 %v104, %v111
    %113 = vst [vmem:[#allocation9] sm:$0xff] %v112
    // Predicated region
    $region30: #{tpu_custom_call.1} parent=1 // pred_check
      _
    $region31: #{tpu_custom_call.1} parent=1 // pred_check_branch
      %115 = sbr.rel (0) target = $region33
    $region32: #{tpu_custom_call.1} parent=1 // pred_region
      %117 = vsyncadd [#allocation4], 0
      %s119 = sshll.u32 [#allocation8], 4
      %s120 = int_to_ptr.vmem [resolvable:$true] %s119
      %s121 = sshll.u32 %s4, 4
      %s122 = int_to_ptr.hbm [resolvable:$true] %s121
      %124 = dma.vmem_to_hbm [thread:$0]  %s120, 128, %s122, [#allocation4]
    $region33: #{tpu_custom_call.1} parent=1 // pred_fallthru
      _
    // Predicated region
    $region34: #{tpu_custom_call.1} parent=1 // pred_check
      _
    $region35: #{tpu_custom_call.1} parent=1 // pred_check_branch
      %126 = sbr.rel (0) target = $region37
    $region36: #{tpu_custom_call.1} parent=1 // pred_region
      %128 = vsyncadd [#allocation10], 0
      %s130 = sshll.u32 [#allocation9], 4
      %s131 = int_to_ptr.vmem [resolvable:$true] %s130
      %s132 = sshll.u32 %s5, 4
      %s133 = int_to_ptr.hbm [resolvable:$true] %s132
      %135 = dma.vmem_to_hbm [thread:$0]  %s131, 128, %s133, [#allocation10]
    $region37: #{tpu_custom_call.1} parent=1 // pred_fallthru
      _
    // Predicated region
    $region38: #{tpu_custom_call.1} parent=1 // pred_check
      _
    $region39: #{tpu_custom_call.1} parent=1 // pred_check_branch
      %137 = sbr.rel (0) target = $region41
    $region40: #{tpu_custom_call.1} parent=1 // pred_region
      %139 = dma.done [#allocation4], 128
    $region41: #{tpu_custom_call.1} parent=1 // pred_fallthru
      _
    // Predicated region
    $region42: #{tpu_custom_call.1} parent=1 // pred_check
      _
    $region43: #{tpu_custom_call.1} parent=1 // pred_check_branch
      %141 = sbr.rel (0) target = $region45
    $region44: #{tpu_custom_call.1} parent=1 // pred_region
      %143 = dma.done [#allocation10], 128
    $region45: #{tpu_custom_call.1} parent=1 // pred_fallthru
      _
    %144 = vsyncpa [#allocation3], 1
    %145 = vsyncpa [#allocation6], 1
    %146 = vsyncpa [#allocation4], 1
    %147 = vsyncpa [#allocation10], 1

</llo_original>
